<compile_context>
chip_gen: v7x
topology: tpu7x:2x2x1
jax: 0.10.0
libtpu: 0.0.40
codegen_flags: <defaults>
</compile_context>

<pallas_src>
import functools

import jax
import jax.numpy as jnp
import numpy as np
from jax import lax
from jax.experimental import pallas as pl
from jax.experimental.pallas import tpu as pltpu


def _gmlp_fused_kernel(n_layers, do_softmax, skip_flags, *refs):
    """All layers unrolled in one kernel; h/v never leave VMEM between layers."""
    h_ref, v_ref = refs[0], refs[1]
    param_refs = refs[2:2 + 4 * n_layers]
    h_out_ref = refs[2 + 4 * n_layers]

    h = h_ref[...]                        # (B, N)
    v = v_ref[...]                        # (N, D)

    for i in range(n_layers):
        w1 = param_refs[4 * i + 0][...]   # (hid, D)
        b1 = param_refs[4 * i + 1][...]   # (1, hid)
        w2 = param_refs[4 * i + 2][...]   # (m, hid)
        b2 = param_refs[4 * i + 3][...]   # (1, m)

        # TinyMLP: l2(relu(l1(v))). dot_general contracts the weights' last dim
        # directly -- no materialized .T (keeps the XLU free for the softmax reduce).
        z1 = lax.dot_general(v, w1, dimension_numbers=(((1,), (1,)), ((), ())),
                             preferred_element_type=jnp.float32) + b1
        z1 = jnp.maximum(z1, 0.0)
        a = lax.dot_general(z1, w2, dimension_numbers=(((1,), (1,)), ((), ())),
                            preferred_element_type=jnp.float32) + b2

        if skip_flags[i]:
            a = a + v                     # valid only when m_i == node_dim

        if do_softmax:
            # F.softmax(a, dim=0): normalize each column over the row axis.
            a_max = jnp.max(a, axis=0, keepdims=True)
            e = jnp.exp(a - a_max)
            denom = jnp.sum(e, axis=0, keepdims=True)
            a = e * pl.reciprocal(denom, approx=True)   # EUP slot, otherwise idle

        h = jnp.dot(h, a, preferred_element_type=jnp.float32)            # (B, m)
        if i != n_layers - 1:
            # v <- a.T @ v without materializing a.T (contract the row axes).
            v = lax.dot_general(a, v, dimension_numbers=(((0,), (0,)), ((), ())),
                                preferred_element_type=jnp.float32)      # (m, D)

    h_out_ref[...] = h


def _cost_estimate(B, N, D, params, do_softmax):
    flops = 0
    transcendentals = 0
    rows = N
    for i, (w1, _b1, w2, _b2) in enumerate(params):
        hid = w1.shape[0]
        m = w2.shape[0]
        flops += 2 * rows * D * hid       # l1
        flops += 2 * rows * hid * m       # l2
        flops += 2 * B * rows * m         # h @ a
        if i != len(params) - 1:
            flops += 2 * m * rows * D     # a.T @ v
        if do_softmax:
            transcendentals += rows * m   # exp
        rows = m
    return flops, transcendentals


def gmlp_forward(x, V, params, *, do_softmax, skip_connection):
    """Whole GMLP forward as a single fused pallas_call."""
    B, N = x.shape
    Nv, D = V.shape
    assert N == Nv, "x last dim must match V's number of rows"
    n = len(params)
    skip_flags = tuple(bool(skip_connection) and (i != n - 1) for i in range(n))
    for i, (w1, b1, w2, b2) in enumerate(params):
        if skip_flags[i]:
            assert w2.shape[0] == D, "skip_connection requires m_i == node_dim"

    flat_params = [p for layer in params for p in layer]
    m_last = params[-1][2].shape[0]

    flops, transc = _cost_estimate(B, N, D, params, do_softmax)
    bytes_accessed = sum(int(np.prod(a.shape)) * 4 for a in [x, V] + flat_params)
    bytes_accessed += B * m_last * 4

    kernel = functools.partial(_gmlp_fused_kernel, n, do_softmax, skip_flags)
    vmem = pl.BlockSpec(memory_space=pltpu.MemorySpace.VMEM)

    return pl.pallas_call(
        kernel,
        out_shape=jax.ShapeDtypeStruct((B, m_last), jnp.float32),
        in_specs=[vmem] * (2 + 4 * n),
        out_specs=vmem,
        cost_estimate=pl.CostEstimate(flops=flops, transcendentals=transc,
                                      bytes_accessed=bytes_accessed),
    )(x, V, *flat_params)


def init_gmlp_params(key, m_layer_list, node_dim, enlarge=1):
    """Deterministic init matching nn.Linear default (uniform +-1/sqrt(fan_in))."""
    params = []
    for m in m_layer_list:
        hid = m * enlarge
        key, k1, k2, k3, k4 = jax.random.split(key, 5)
        bound1 = 1.0 / np.sqrt(node_dim)
        w1 = jax.random.uniform(k1, (hid, node_dim), jnp.float32, -bound1, bound1)
        b1 = jax.random.uniform(k2, (1, hid), jnp.float32, -bound1, bound1)
        bound2 = 1.0 / np.sqrt(hid)
        w2 = jax.random.uniform(k3, (m, hid), jnp.float32, -bound2, bound2)
        b2 = jax.random.uniform(k4, (1, m), jnp.float32, -bound2, bound2)
        params.append((w1, b1, w2, b2))
    return params


def gmlp_forward_ref(x, V, params, *, do_softmax, skip_connection):
    """Pure-JAX reference for verification."""
    h, v = x, V
    n = len(params)
    for i, (w1, b1, w2, b2) in enumerate(params):
        a = jnp.maximum(v @ w1.T + b1, 0.0) @ w2.T + b2
        if skip_connection and (i != n - 1):
            a = a + v
        if do_softmax:
            a = jax.nn.softmax(a, axis=0)
        h = h @ a
        v = a.T @ v
    return h


if __name__ == "__main__":
    key = jax.random.PRNGKey(0)
    kx, kv, kp1, kp2 = jax.random.split(key, 4)

    batch, N, node_dim = 2, 16, 8
    x = jax.random.normal(kx, (batch, N), dtype=jnp.float32)       # h_0
    V = jax.random.normal(kv, (N, node_dim), dtype=jnp.float32)    # the V matrix

    # Tolerance is 1e-3 because the softmax denominator uses the EUP approximate
    # reciprocal (pl.reciprocal(..., approx=True)); the f32 path is otherwise exact.
    TOL = 1e-3

    # Config A: softmax, no skip connections.
    params_a = init_gmlp_params(kp1, [12, 8], node_dim, enlarge=1)
    out_a = gmlp_forward(x, V, params_a, do_softmax=True, skip_connection=False)
    out_a = jax.block_until_ready(out_a)
    ref_a = gmlp_forward_ref(x, V, params_a, do_softmax=True, skip_connection=False)
    np.testing.assert_allclose(np.asarray(out_a), np.asarray(ref_a), rtol=TOL, atol=TOL)

    # Config B: 3 fused layers, softmax + skip connections (m_i == node_dim where skipped).
    params_b = init_gmlp_params(kp2, [8, 8, 10], node_dim, enlarge=2)
    out_b = gmlp_forward(x, V, params_b, do_softmax=True, skip_connection=True)
    out_b = jax.block_until_ready(out_b)
    ref_b = gmlp_forward_ref(x, V, params_b, do_softmax=True, skip_connection=True)
    np.testing.assert_allclose(np.asarray(out_b), np.asarray(ref_b), rtol=TOL, atol=TOL)

    print("KERNEL_OK")
</pallas_src>

<mosaic_0001>
module attributes {stable_mosaic.version = 11 : i64} {
  func.func @_gmlp_fused_kernel(%arg0: memref<2x16xf32, #tpu.memory_space<vmem>>, %arg1: memref<16x8xf32, #tpu.memory_space<vmem>>, %arg2: memref<12x8xf32, #tpu.memory_space<vmem>>, %arg3: memref<1x12xf32, #tpu.memory_space<vmem>>, %arg4: memref<12x12xf32, #tpu.memory_space<vmem>>, %arg5: memref<1x12xf32, #tpu.memory_space<vmem>>, %arg6: memref<8x8xf32, #tpu.memory_space<vmem>>, %arg7: memref<1x8xf32, #tpu.memory_space<vmem>>, %arg8: memref<8x8xf32, #tpu.memory_space<vmem>>, %arg9: memref<1x8xf32, #tpu.memory_space<vmem>>, %arg10: memref<2x8xf32, #tpu.memory_space<vmem>>) attributes {dimension_semantics = [], scalar_prefetch = 0 : i64, scratch_operands = 0 : i64, tpu.core_type = #tpu.core_type<tc>} {
    %c0 = arith.constant 0 : index
    %c0_0 = arith.constant 0 : index
    %0 = vector.load %arg0[%c0, %c0_0] : memref<2x16xf32, #tpu.memory_space<vmem>>, vector<2x16xf32>
    %c0_1 = arith.constant 0 : index
    %c0_2 = arith.constant 0 : index
    %1 = vector.load %arg1[%c0_1, %c0_2] : memref<16x8xf32, #tpu.memory_space<vmem>>, vector<16x8xf32>
    %c0_3 = arith.constant 0 : index
    %c0_4 = arith.constant 0 : index
    %2 = vector.load %arg2[%c0_3, %c0_4] : memref<12x8xf32, #tpu.memory_space<vmem>>, vector<12x8xf32>
    %c0_5 = arith.constant 0 : index
    %c0_6 = arith.constant 0 : index
    %3 = vector.load %arg3[%c0_5, %c0_6] : memref<1x12xf32, #tpu.memory_space<vmem>>, vector<1x12xf32>
    %c0_7 = arith.constant 0 : index
    %c0_8 = arith.constant 0 : index
    %4 = vector.load %arg4[%c0_7, %c0_8] : memref<12x12xf32, #tpu.memory_space<vmem>>, vector<12x12xf32>
    %c0_9 = arith.constant 0 : index
    %c0_10 = arith.constant 0 : index
    %5 = vector.load %arg5[%c0_9, %c0_10] : memref<1x12xf32, #tpu.memory_space<vmem>>, vector<1x12xf32>
    %cst = arith.constant dense<0.000000e+00> : vector<16x12xf32>
    %6 = tpu.matmul %1, %2, %cst {dimension_numbers = #tpu.dot_dimension_numbers<[1], [1], [0], [0], [0, 0, 1, 0], [], []>} : vector<16x8xf32>, vector<12x8xf32>, vector<16x12xf32> -> vector<16x12xf32>
    %7 = vector.broadcast %3 : vector<1x12xf32> to vector<16x12xf32>
    %8 = arith.addf %6, %7 : vector<16x12xf32>
    %cst_11 = arith.constant 0.000000e+00 : f32
    %9 = vector.broadcast %cst_11 : f32 to vector<16x12xf32>
    %10 = arith.maximumf %8, %9 : vector<16x12xf32>
    %cst_12 = arith.constant dense<0.000000e+00> : vector<16x12xf32>
    %11 = tpu.matmul %10, %4, %cst_12 {dimension_numbers = #tpu.dot_dimension_numbers<[1], [1], [0], [0], [0, 0, 1, 0], [], []>} : vector<16x12xf32>, vector<12x12xf32>, vector<16x12xf32> -> vector<16x12xf32>
    %12 = vector.broadcast %5 : vector<1x12xf32> to vector<16x12xf32>
    %13 = arith.addf %11, %12 : vector<16x12xf32>
    %cst_13 = arith.constant dense<0xFF800000> : vector<12xf32>
    %14 = vector.multi_reduction <maximumf>, %13, %cst_13 [0] : vector<16x12xf32> to vector<12xf32>
    %15 = vector.shape_cast %14 : vector<12xf32> to vector<1x12xf32>
    %16 = vector.broadcast %15 : vector<1x12xf32> to vector<16x12xf32>
    %17 = arith.subf %13, %16 : vector<16x12xf32>
    %18 = math.exp %17 : vector<16x12xf32>
    %cst_14 = arith.constant dense<0.000000e+00> : vector<12xf32>
    %19 = vector.multi_reduction <add>, %18, %cst_14 [0] : vector<16x12xf32> to vector<12xf32>
    %20 = vector.shape_cast %19 : vector<12xf32> to vector<1x12xf32>
    %21 = tpu.reciprocal %20 {approx = true} : vector<1x12xf32> -> vector<1x12xf32>
    %22 = vector.broadcast %21 : vector<1x12xf32> to vector<16x12xf32>
    %23 = arith.mulf %18, %22 : vector<16x12xf32>
    %cst_15 = arith.constant dense<0.000000e+00> : vector<2x12xf32>
    %24 = tpu.matmul %0, %23, %cst_15 {dimension_numbers = #tpu.dot_dimension_numbers<[1], [0], [0], [1], [0, 0, 1, 1], [], []>} : vector<2x16xf32>, vector<16x12xf32>, vector<2x12xf32> -> vector<2x12xf32>
    %cst_16 = arith.constant dense<0.000000e+00> : vector<12x8xf32>
    %25 = tpu.matmul %23, %1, %cst_16 {dimension_numbers = #tpu.dot_dimension_numbers<[0], [0], [1], [1], [0, 1, 1, 1], [], []>} : vector<16x12xf32>, vector<16x8xf32>, vector<12x8xf32> -> vector<12x8xf32>
    %c0_17 = arith.constant 0 : index
    %c0_18 = arith.constant 0 : index
    %26 = vector.load %arg6[%c0_17, %c0_18] : memref<8x8xf32, #tpu.memory_space<vmem>>, vector<8x8xf32>
    %c0_19 = arith.constant 0 : index
    %c0_20 = arith.constant 0 : index
    %27 = vector.load %arg7[%c0_19, %c0_20] : memref<1x8xf32, #tpu.memory_space<vmem>>, vector<1x8xf32>
    %c0_21 = arith.constant 0 : index
    %c0_22 = arith.constant 0 : index
    %28 = vector.load %arg8[%c0_21, %c0_22] : memref<8x8xf32, #tpu.memory_space<vmem>>, vector<8x8xf32>
    %c0_23 = arith.constant 0 : index
    %c0_24 = arith.constant 0 : index
    %29 = vector.load %arg9[%c0_23, %c0_24] : memref<1x8xf32, #tpu.memory_space<vmem>>, vector<1x8xf32>
    %cst_25 = arith.constant dense<0.000000e+00> : vector<12x8xf32>
    %30 = tpu.matmul %25, %26, %cst_25 {dimension_numbers = #tpu.dot_dimension_numbers<[1], [1], [0], [0], [0, 0, 1, 0], [], []>} : vector<12x8xf32>, vector<8x8xf32>, vector<12x8xf32> -> vector<12x8xf32>
    %31 = vector.broadcast %27 : vector<1x8xf32> to vector<12x8xf32>
    %32 = arith.addf %30, %31 : vector<12x8xf32>
    %cst_26 = arith.constant 0.000000e+00 : f32
    %33 = vector.broadcast %cst_26 : f32 to vector<12x8xf32>
    %34 = arith.maximumf %32, %33 : vector<12x8xf32>
    %cst_27 = arith.constant dense<0.000000e+00> : vector<12x8xf32>
    %35 = tpu.matmul %34, %28, %cst_27 {dimension_numbers = #tpu.dot_dimension_numbers<[1], [1], [0], [0], [0, 0, 1, 0], [], []>} : vector<12x8xf32>, vector<8x8xf32>, vector<12x8xf32> -> vector<12x8xf32>
    %36 = vector.broadcast %29 : vector<1x8xf32> to vector<12x8xf32>
    %37 = arith.addf %35, %36 : vector<12x8xf32>
    %cst_28 = arith.constant dense<0xFF800000> : vector<8xf32>
    %38 = vector.multi_reduction <maximumf>, %37, %cst_28 [0] : vector<12x8xf32> to vector<8xf32>
    %39 = vector.shape_cast %38 : vector<8xf32> to vector<1x8xf32>
    %40 = vector.broadcast %39 : vector<1x8xf32> to vector<12x8xf32>
    %41 = arith.subf %37, %40 : vector<12x8xf32>
    %42 = math.exp %41 : vector<12x8xf32>
    %cst_29 = arith.constant dense<0.000000e+00> : vector<8xf32>
    %43 = vector.multi_reduction <add>, %42, %cst_29 [0] : vector<12x8xf32> to vector<8xf32>
    %44 = vector.shape_cast %43 : vector<8xf32> to vector<1x8xf32>
    %45 = tpu.reciprocal %44 {approx = true} : vector<1x8xf32> -> vector<1x8xf32>
    %46 = vector.broadcast %45 : vector<1x8xf32> to vector<12x8xf32>
    %47 = arith.mulf %42, %46 : vector<12x8xf32>
    %cst_30 = arith.constant dense<0.000000e+00> : vector<2x8xf32>
    %48 = tpu.matmul %24, %47, %cst_30 {dimension_numbers = #tpu.dot_dimension_numbers<[1], [0], [0], [1], [0, 0, 1, 1], [], []>} : vector<2x12xf32>, vector<12x8xf32>, vector<2x8xf32> -> vector<2x8xf32>
    %c0_31 = arith.constant 0 : index
    %c0_32 = arith.constant 0 : index
    %49 = vector.load %arg10[%c0_31, %c0_32] : memref<2x8xf32, #tpu.memory_space<vmem>>, vector<2x8xf32>
    tpu.vector_store %arg10[%c0_31, %c0_32], %48 {strides = array<i32>} : memref<2x8xf32, #tpu.memory_space<vmem>>, vector<2x8xf32>,
    return
  }
}

</mosaic_0001>

<llo_original>
// kernel: tpu_custom_call.1
$region0: #{tpu_custom_call.1}
  #allocation0 [shape = 'u32[]', space=smem, size = 0x4, offset = 0x4, fixed_abs, tag = 'smem constant byte address 0x4 - core index']
  #allocation1 [shape = 'u32[144,128]{1,0:T(1,128)}', space=vmem, size = 0x12000, scoped, tag = 'internal scratch']
  %s0 = inlined_call_operand.vmem [shape: f32[2,16], index: 0, kind: input, shape index: {}]
  %s1 = inlined_call_operand.vmem [shape: f32[16,8], index: 1, kind: input, shape index: {}]
  %s2 = inlined_call_operand.vmem [shape: f32[12,8], index: 2, kind: input, shape index: {}]
  %s3 = inlined_call_operand.vmem [shape: f32[1,12], index: 3, kind: input, shape index: {}]
  %s4 = inlined_call_operand.vmem [shape: f32[12,12], index: 4, kind: input, shape index: {}]
  %s5 = inlined_call_operand.vmem [shape: f32[1,12], index: 5, kind: input, shape index: {}]
  %s6 = inlined_call_operand.vmem [shape: f32[8,8], index: 6, kind: input, shape index: {}]
  %s7 = inlined_call_operand.vmem [shape: f32[1,8], index: 7, kind: input, shape index: {}]
  %s8 = inlined_call_operand.vmem [shape: f32[8,8], index: 8, kind: input, shape index: {}]
  %s9 = inlined_call_operand.vmem [shape: f32[1,8], index: 9, kind: input, shape index: {}]
  %s10 = inlined_call_operand.hbm [shape: f32[2,8], index: 10, kind: output, shape index: {}]
  %s11 = sld [smem:[#allocation0]]
  $region50: #{tpu_custom_call.1} parent=0
    _
  %s13 = ssub.s32 1, %s11
  %s14 = scalar_select 0, %s13, %s11
  $region1: #{tpu_custom_call.1} parent=0
    #allocation2 [shape = 'u8[1024]{0}', space=vmem, size = 0x400, scoped, tag = 'output window, operand 0, single buffered']
    #allocation3 [shape = 's32[1]{0}', space=sflag, size = 0x4, scoped, tag = 'scoped memory for tpu_custom_call.1']
    %15 = vsyncpa [#allocation3], 0
    // Predicated region
    $region2: #{tpu_custom_call.1} parent=1 // pred_check
      _
    $region3: #{tpu_custom_call.1} parent=1 // pred_check_branch
      %17 = sbr.rel (0) target = $region5
    $region4: #{tpu_custom_call.1} parent=1 // pred_region
      _
    $region5: #{tpu_custom_call.1} parent=1 // pred_fallthru
      _
    // Predicated region
    $region6: #{tpu_custom_call.1} parent=1 // pred_check
      _
    $region7: #{tpu_custom_call.1} parent=1 // pred_check_branch
      %19 = sbr.rel (0) target = $region9
    $region8: #{tpu_custom_call.1} parent=1 // pred_region
      _
    $region9: #{tpu_custom_call.1} parent=1 // pred_fallthru
      _
    // Predicated region
    $region10: #{tpu_custom_call.1} parent=1 // pred_check
      _
    $region11: #{tpu_custom_call.1} parent=1 // pred_check_branch
      %21 = sbr.rel (0) target = $region13
    $region12: #{tpu_custom_call.1} parent=1 // pred_region
      _
    $region13: #{tpu_custom_call.1} parent=1 // pred_fallthru
      _
    // Predicated region
    $region14: #{tpu_custom_call.1} parent=1 // pred_check
      _
    $region15: #{tpu_custom_call.1} parent=1 // pred_check_branch
      %23 = sbr.rel (0) target = $region17
    $region16: #{tpu_custom_call.1} parent=1 // pred_region
      _
    $region17: #{tpu_custom_call.1} parent=1 // pred_fallthru
      _
    // Predicated region
    $region18: #{tpu_custom_call.1} parent=1 // pred_check
      _
    $region19: #{tpu_custom_call.1} parent=1 // pred_check_branch
      %25 = sbr.rel (0) target = $region21
    $region20: #{tpu_custom_call.1} parent=1 // pred_region
      _
    $region21: #{tpu_custom_call.1} parent=1 // pred_fallthru
      _
    // Predicated region
    $region22: #{tpu_custom_call.1} parent=1 // pred_check
      _
    $region23: #{tpu_custom_call.1} parent=1 // pred_check_branch
      %27 = sbr.rel (0) target = $region25
    $region24: #{tpu_custom_call.1} parent=1 // pred_region
      _
    $region25: #{tpu_custom_call.1} parent=1 // pred_fallthru
      _
    // Predicated region
    $region26: #{tpu_custom_call.1} parent=1 // pred_check
      _
    $region27: #{tpu_custom_call.1} parent=1 // pred_check_branch
      %29 = sbr.rel (0) target = $region29
    $region28: #{tpu_custom_call.1} parent=1 // pred_region
      _
    $region29: #{tpu_custom_call.1} parent=1 // pred_fallthru
      _
    // Predicated region
    $region30: #{tpu_custom_call.1} parent=1 // pred_check
      _
    $region31: #{tpu_custom_call.1} parent=1 // pred_check_branch
      %31 = sbr.rel (0) target = $region33
    $region32: #{tpu_custom_call.1} parent=1 // pred_region
      _
    $region33: #{tpu_custom_call.1} parent=1 // pred_fallthru
      _
    // Predicated region
    $region34: #{tpu_custom_call.1} parent=1 // pred_check
      _
    $region35: #{tpu_custom_call.1} parent=1 // pred_check_branch
      %33 = sbr.rel (0) target = $region37
    $region36: #{tpu_custom_call.1} parent=1 // pred_region
      _
    $region37: #{tpu_custom_call.1} parent=1 // pred_fallthru
      _
    // Predicated region
    $region38: #{tpu_custom_call.1} parent=1 // pred_check
      _
    $region39: #{tpu_custom_call.1} parent=1 // pred_check_branch
      %35 = sbr.rel (0) target = $region41
    $region40: #{tpu_custom_call.1} parent=1 // pred_region
      _
    $region41: #{tpu_custom_call.1} parent=1 // pred_fallthru
      _
    %v36 = vld [vmem:[%s0] sm:$0x3]
    %v37 = vld [vmem:[%s1] sm:$0xff]
    %v38 = vld [vmem:[%s1 + $0x8] sm:$0xff]
    %v39 = vld [vmem:[%s2] sm:$0xff]
    %v40 = vld [vmem:[%s2 + $0x8] sm:$0xf]
    %v41 = vld [vmem:[%s3] sm:$0x1]
    %v42 = vld [vmem:[%s4] sm:$0xff]
    %v43 = vld [vmem:[%s4 + $0x8] sm:$0xf]
    %v44 = vld [vmem:[%s5] sm:$0x1]
    %v46 = vlaneseq
    %v47 = vshrl.u32 %v46, 7
    %v48 = vsub.s32 0, %v47
    %v49 = vrot.slane %v41, %v48
    %vm51 = vcmask 64512
    %v53 = vsel %vm51, %v37, 0
    %v56 = vsel %vm51, %v38, 0
    %v59 = vsel %vm51, %v39, 0
    %v62 = vsel %vm51, %v40, 0
    %64 = vmatprep.subr.mxu0 0.0
    %65 = vmatpush1.xpose.msra.mxu0 %v59
    %66 = vmatprep.subr.mxu0 0.0
    %67 = vmatpush1.xpose.msra.mxu0 %v62
    %68 = vmatprep.subr.mxu0 0.0
    %69 = vmatpush1.xpose.msra.mxu0 0.0
    %70 = vmatprep.subr.mxu0 0.0
    %71 = vmatpush1.xpose.msra.mxu0 0.0
    %72 = vmatprep.subr.mxu0 0.0
    %73 = vmatpush1.xpose.msra.mxu0 0.0
    %74 = vmatprep.subr.mxu0 0.0
    %75 = vmatpush1.xpose.msra.mxu0 0.0
    %76 = vmatprep.subr.mxu0 0.0
    %77 = vmatpush1.xpose.msra.mxu0 0.0
    %78 = vmatprep.subr.mxu0 0.0
    %79 = vmatpush1.xpose.msra.mxu0 0.0
    %80 = vmatprep.subr.mxu0 0.0
    %81 = vmatpush1.xpose.msra.mxu0 0.0
    %82 = vmatprep.subr.mxu0 0.0
    %83 = vmatpush1.xpose.msra.mxu0 0.0
    %84 = vmatprep.subr.mxu0 0.0
    %85 = vmatpush1.xpose.msra.mxu0 0.0
    %86 = vmatprep.subr.mxu0 0.0
    %87 = vmatpush1.xpose.msra.mxu0 0.0
    %88 = vmatprep.subr.mxu0 0.0
    %89 = vmatpush1.xpose.msra.mxu0 0.0
    %90 = vmatprep.subr.mxu0 0.0
    %91 = vmatpush1.xpose.msra.mxu0 0.0
    %92 = vmatprep.subr.mxu0 0.0
    %93 = vmatpush1.xpose.msra.mxu0 0.0
    %94 = vmatprep.subr.mxu0 0.0
    %95 = vmatpush1.xpose.msra.mxu0 0.0
    %96 = vmatprep.subr.mxu0 0.0
    %97 = vmatpush1.xpose.msra.mxu0 0.0
    %98 = vmatprep.subr.mxu0 0.0
    %99 = vmatpush1.xpose.msra.mxu0 0.0
    %100 = vmatprep.subr.mxu0 0.0
    %101 = vmatpush1.xpose.msra.mxu0 0.0
    %102 = vmatprep.subr.mxu0 0.0
    %103 = vmatpush1.xpose.msra.mxu0 0.0
    %104 = vmatprep.subr.mxu0 0.0
    %105 = vmatpush1.xpose.msra.mxu0 0.0
    %106 = vmatprep.subr.mxu0 0.0
    %107 = vmatpush1.xpose.msra.mxu0 0.0
    %108 = vmatprep.subr.mxu0 0.0
    %109 = vmatpush1.xpose.msra.mxu0 0.0
    %110 = vmatprep.subr.mxu0 0.0
    %111 = vmatpush1.xpose.msra.mxu0 0.0
    %112 = vmatprep.subr.mxu0 0.0
    %113 = vmatpush1.xpose.msra.mxu0 0.0
    %114 = vmatprep.subr.mxu0 0.0
    %115 = vmatpush1.xpose.msra.mxu0 0.0
    %116 = vmatprep.subr.mxu0 0.0
    %117 = vmatpush1.xpose.msra.mxu0 0.0
    %118 = vmatprep.subr.mxu0 0.0
    %119 = vmatpush1.xpose.msra.mxu0 0.0
    %120 = vmatprep.subr.mxu0 0.0
    %121 = vmatpush1.xpose.msra.mxu0 0.0
    %122 = vmatprep.subr.mxu0 0.0
    %123 = vmatpush1.xpose.msra.mxu0 0.0
    %124 = vmatprep.subr.mxu0 0.0
    %125 = vmatpush1.xpose.msra.mxu0 0.0
    %126 = vmatprep.subr.mxu0 0.0
    %127 = vmatpush1.xpose.msra.mxu0 0.0
    %128 = vmatprep.mubr.f32.mxu0 0.0
    %129 = vmatmul.mubr.f32.gmra.mrb[0].mxu0 %v53
    %v130 = vpop.f32.mrb[0].mxu0
    %v131 = vadd.f32 %v49, %v130
    %v132 = vpop.f32.mrb[0].mxu0
    %133 = vmatprep.mubr.f32.mxu0 0.0
    %134 = vmatmul.mubr.f32.gmra.mrb[0].mxu0 %v56
    %v135 = vpop.f32.mrb[0].mxu0
    %v136 = vadd.f32 %v49, %v135
    %v137 = vpop.f32.mrb[0].mxu0
    %138 = vdwg.mxu0
    %v139 = vmax.f32 %v131, 0.0
    %v140 = vmax.f32 %v136, 0.0
    %v142 = vlaneseq
    %v143 = vshrl.u32 %v142, 7
    %v144 = vsub.s32 0, %v143
    %v145 = vrot.slane %v44, %v144
    %vm147 = vcmask 97280
    %v149 = vsel %vm147, %v139, 0
    %v152 = vsel %vm147, %v140, 0
    %v155 = vsel %vm147, %v42, 0
    %v158 = vsel %vm147, %v43, 0
    %160 = vmatprep.subr.mxu0 0.0
    %161 = vmatpush1.xpose.msra.mxu0 %v155
    %162 = vmatprep.subr.mxu0 0.0
    %163 = vmatpush1.xpose.msra.mxu0 %v158
    %164 = vmatprep.subr.mxu0 0.0
    %165 = vmatpush1.xpose.msra.mxu0 0.0
    %166 = vmatprep.subr.mxu0 0.0
    %167 = vmatpush1.xpose.msra.mxu0 0.0
    %168 = vmatprep.subr.mxu0 0.0
    %169 = vmatpush1.xpose.msra.mxu0 0.0
    %170 = vmatprep.subr.mxu0 0.0
    %171 = vmatpush1.xpose.msra.mxu0 0.0
    %172 = vmatprep.subr.mxu0 0.0
    %173 = vmatpush1.xpose.msra.mxu0 0.0
    %174 = vmatprep.subr.mxu0 0.0
    %175 = vmatpush1.xpose.msra.mxu0 0.0
    %176 = vmatprep.subr.mxu0 0.0
    %177 = vmatpush1.xpose.msra.mxu0 0.0
    %178 = vmatprep.subr.mxu0 0.0
    %179 = vmatpush1.xpose.msra.mxu0 0.0
    %180 = vmatprep.subr.mxu0 0.0
    %181 = vmatpush1.xpose.msra.mxu0 0.0
    %182 = vmatprep.subr.mxu0 0.0
    %183 = vmatpush1.xpose.msra.mxu0 0.0
    %184 = vmatprep.subr.mxu0 0.0
    %185 = vmatpush1.xpose.msra.mxu0 0.0
    %186 = vmatprep.subr.mxu0 0.0
    %187 = vmatpush1.xpose.msra.mxu0 0.0
    %188 = vmatprep.subr.mxu0 0.0
    %189 = vmatpush1.xpose.msra.mxu0 0.0
    %190 = vmatprep.subr.mxu0 0.0
    %191 = vmatpush1.xpose.msra.mxu0 0.0
    %192 = vmatprep.subr.mxu0 0.0
    %193 = vmatpush1.xpose.msra.mxu0 0.0
    %194 = vmatprep.subr.mxu0 0.0
    %195 = vmatpush1.xpose.msra.mxu0 0.0
    %196 = vmatprep.subr.mxu0 0.0
    %197 = vmatpush1.xpose.msra.mxu0 0.0
    %198 = vmatprep.subr.mxu0 0.0
    %199 = vmatpush1.xpose.msra.mxu0 0.0
    %200 = vmatprep.subr.mxu0 0.0
    %201 = vmatpush1.xpose.msra.mxu0 0.0
    %202 = vmatprep.subr.mxu0 0.0
    %203 = vmatpush1.xpose.msra.mxu0 0.0
    %204 = vmatprep.subr.mxu0 0.0
    %205 = vmatpush1.xpose.msra.mxu0 0.0
    %206 = vmatprep.subr.mxu0 0.0
    %207 = vmatpush1.xpose.msra.mxu0 0.0
    %208 = vmatprep.subr.mxu0 0.0
    %209 = vmatpush1.xpose.msra.mxu0 0.0
    %210 = vmatprep.subr.mxu0 0.0
    %211 = vmatpush1.xpose.msra.mxu0 0.0
    %212 = vmatprep.subr.mxu0 0.0
    %213 = vmatpush1.xpose.msra.mxu0 0.0
    %214 = vmatprep.subr.mxu0 0.0
    %215 = vmatpush1.xpose.msra.mxu0 0.0
    %216 = vmatprep.subr.mxu0 0.0
    %217 = vmatpush1.xpose.msra.mxu0 0.0
    %218 = vmatprep.subr.mxu0 0.0
    %219 = vmatpush1.xpose.msra.mxu0 0.0
    %220 = vmatprep.subr.mxu0 0.0
    %221 = vmatpush1.xpose.msra.mxu0 0.0
    %222 = vmatprep.subr.mxu0 0.0
    %223 = vmatpush1.xpose.msra.mxu0 0.0
    %224 = vmatprep.mubr.f32.mxu0 0.0
    %225 = vmatmul.mubr.f32.gmra.mrb[0].mxu0 %v149
    %v226 = vpop.f32.mrb[0].mxu0
    %v227 = vadd.f32 %v145, %v226
    %v228 = vpop.f32.mrb[0].mxu0
    %229 = vmatprep.mubr.f32.mxu0 0.0
    %230 = vmatmul.mubr.f32.gmra.mrb[0].mxu0 %v152
    %v231 = vpop.f32.mrb[0].mxu0
    %v232 = vadd.f32 %v145, %v231
    %v233 = vpop.f32.mrb[0].mxu0
    %234 = vdwg.mxu0
    %v235 = vsel %vm147, %v227, -inf
    %v236 = vsel %vm147, %v232, -inf
    %v237 = vmax.f32 %v235, %v236
    %v238 = vrot.slane %v237, 4
    %v239 = vmax.f32 %v237, %v238
    %v240 = vrot.slane %v239, 2
    %v241 = vmax.f32 %v239, %v240
    %v242 = vrot.slane %v241, 1
    %v243 = vmax.f32 %v241, %v242
    %v244 = vsub.f32 %v227, %v243
    %v245 = vsub.f32 %v232, %v243
    %v246 = vmul.f32 %v244, 1.442695
    %v247 = vpow.pop %v246
    %v248 = vmul.f32 %v245, 1.442695
    %v249 = vpow.pop %v248
    %v250 = vsel %vm147, %v247, 0.0
    %v251 = vsel %vm147, %v249, 0.0
    %v252 = vadd.f32 %v250, %v251
    %v253 = vrot.slane %v252, 4
    %v254 = vadd.f32 %v252, %v253
    %v255 = vrot.slane %v254, 2
    %v256 = vadd.f32 %v254, %v255
    %v257 = vrot.slane %v256, 1
    %v258 = vadd.f32 %v256, %v257
    %v259 = vrcp.pop %v258
    %v260 = vmul.f32 %v247, %v259
    %v261 = vmul.f32 %v249, %v259
    %vm262 = vcmask 130048
    %v264 = vsel %vm262, %v36, 0
    %266 = vmatprep.subr.mxu0 0.0
    %267 = vmatpush1.msra.mxu0 %v260
    %268 = vmatprep.subr.mxu0 0.0
    %269 = vmatpush1.msra.mxu0 %v261
    %270 = vmatprep.subr.mxu0 0.0
    %271 = vmatpush1.msra.mxu0 0.0
    %272 = vmatprep.subr.mxu0 0.0
    %273 = vmatpush1.msra.mxu0 0.0
    %274 = vmatprep.subr.mxu0 0.0
    %275 = vmatpush1.msra.mxu0 0.0
    %276 = vmatprep.subr.mxu0 0.0
    %277 = vmatpush1.msra.mxu0 0.0
    %278 = vmatprep.subr.mxu0 0.0
    %279 = vmatpush1.msra.mxu0 0.0
    %280 = vmatprep.subr.mxu0 0.0
    %281 = vmatpush1.msra.mxu0 0.0
    %282 = vmatprep.subr.mxu0 0.0
    %283 = vmatpush1.msra.mxu0 0.0
    %284 = vmatprep.subr.mxu0 0.0
    %285 = vmatpush1.msra.mxu0 0.0
    %286 = vmatprep.subr.mxu0 0.0
    %287 = vmatpush1.msra.mxu0 0.0
    %288 = vmatprep.subr.mxu0 0.0
    %289 = vmatpush1.msra.mxu0 0.0
    %290 = vmatprep.subr.mxu0 0.0
    %291 = vmatpush1.msra.mxu0 0.0
    %292 = vmatprep.subr.mxu0 0.0
    %293 = vmatpush1.msra.mxu0 0.0
    %294 = vmatprep.subr.mxu0 0.0
    %295 = vmatpush1.msra.mxu0 0.0
    %296 = vmatprep.subr.mxu0 0.0
    %297 = vmatpush1.msra.mxu0 0.0
    %298 = vmatprep.subr.mxu0 0.0
    %299 = vmatpush1.msra.mxu0 0.0
    %300 = vmatprep.subr.mxu0 0.0
    %301 = vmatpush1.msra.mxu0 0.0
    %302 = vmatprep.subr.mxu0 0.0
    %303 = vmatpush1.msra.mxu0 0.0
    %304 = vmatprep.subr.mxu0 0.0
    %305 = vmatpush1.msra.mxu0 0.0
    %306 = vmatprep.subr.mxu0 0.0
    %307 = vmatpush1.msra.mxu0 0.0
    %308 = vmatprep.subr.mxu0 0.0
    %309 = vmatpush1.msra.mxu0 0.0
    %310 = vmatprep.subr.mxu0 0.0
    %311 = vmatpush1.msra.mxu0 0.0
    %312 = vmatprep.subr.mxu0 0.0
    %313 = vmatpush1.msra.mxu0 0.0
    %314 = vmatprep.subr.mxu0 0.0
    %315 = vmatpush1.msra.mxu0 0.0
    %316 = vmatprep.subr.mxu0 0.0
    %317 = vmatpush1.msra.mxu0 0.0
    %318 = vmatprep.subr.mxu0 0.0
    %319 = vmatpush1.msra.mxu0 0.0
    %320 = vmatprep.subr.mxu0 0.0
    %321 = vmatpush1.msra.mxu0 0.0
    %322 = vmatprep.subr.mxu0 0.0
    %323 = vmatpush1.msra.mxu0 0.0
    %324 = vmatprep.subr.mxu0 0.0
    %325 = vmatpush1.msra.mxu0 0.0
    %326 = vmatprep.subr.mxu0 0.0
    %327 = vmatpush1.msra.mxu0 0.0
    %328 = vmatprep.subr.mxu0 0.0
    %329 = vmatpush1.msra.mxu0 0.0
    %330 = vmatprep.mubr.f32.mxu0 0.0
    %331 = vmatmul.mubr.f32.gmra.mrb[0].mxu0 %v264
    %v332 = vpop.f32.mrb[0].mxu0
    %v333 = vadd.f32 0.0, %v332
    %v334 = vpop.f32.mrb[0].mxu0
    %335 = vdwg.mxu0
    %336 = vxpose.xlu0.b32.start [1/16] %v260, 128
    %337 = vxpose.xlu0.b32.cont [2/16] %v261, 128
    %338 = vxpose.xlu0.b32.cont [3/16] 0.0, 128
    %339 = vxpose.xlu0.b32.cont [4/16] 0.0, 128
    %340 = vxpose.xlu0.b32.cont [5/16] 0.0, 128
    %341 = vxpose.xlu0.b32.cont [6/16] 0.0, 128
    %342 = vxpose.xlu0.b32.cont [7/16] 0.0, 128
    %343 = vxpose.xlu0.b32.cont [8/16] 0.0, 128
    %344 = vxpose.xlu0.b32.cont [9/16] 0.0, 128
    %345 = vxpose.xlu0.b32.cont [10/16] 0.0, 128
    %346 = vxpose.xlu0.b32.cont [11/16] 0.0, 128
    %347 = vxpose.xlu0.b32.cont [12/16] 0.0, 128
    %348 = vxpose.xlu0.b32.cont [13/16] 0.0, 128
    %349 = vxpose.xlu0.b32.cont [14/16] 0.0, 128
    %350 = vxpose.xlu0.b32.cont [15/16] 0.0, 128
    %351 = vxpose.xlu0.b32.end [16/16] 0.0, 128
    %v352 = vpop.trf.xlu0
    %v353 = vpop.trf.xlu0
    %v354 = vpop.trf.xlu0
    %v355 = vpop.trf.xlu0
    %v356 = vpop.trf.xlu0
    %v357 = vpop.trf.xlu0
    %v358 = vpop.trf.xlu0
    %v359 = vpop.trf.xlu0
    %v360 = vpop.trf.xlu0
    %v361 = vpop.trf.xlu0
    %v362 = vpop.trf.xlu0
    %v363 = vpop.trf.xlu0
    %v364 = vpop.trf.xlu0
    %v365 = vpop.trf.xlu0
    %v366 = vpop.trf.xlu0
    %v367 = vpop.trf.xlu0
    %v369 = vsel %vm262, %v352, 0
    %v372 = vsel %vm262, %v353, 0
    %374 = vmatprep.subr.mxu0 0.0
    %375 = vmatpush1.msra.mxu0 %v37
    %376 = vmatprep.subr.mxu0 0.0
    %377 = vmatpush1.msra.mxu0 %v38
    %378 = vmatprep.subr.mxu0 0.0
    %379 = vmatpush1.msra.mxu0 0.0
    %380 = vmatprep.subr.mxu0 0.0
    %381 = vmatpush1.msra.mxu0 0.0
    %382 = vmatprep.subr.mxu0 0.0
    %383 = vmatpush1.msra.mxu0 0.0
    %384 = vmatprep.subr.mxu0 0.0
    %385 = vmatpush1.msra.mxu0 0.0
    %386 = vmatprep.subr.mxu0 0.0
    %387 = vmatpush1.msra.mxu0 0.0
    %388 = vmatprep.subr.mxu0 0.0
    %389 = vmatpush1.msra.mxu0 0.0
    %390 = vmatprep.subr.mxu0 0.0
    %391 = vmatpush1.msra.mxu0 0.0
    %392 = vmatprep.subr.mxu0 0.0
    %393 = vmatpush1.msra.mxu0 0.0
    %394 = vmatprep.subr.mxu0 0.0
    %395 = vmatpush1.msra.mxu0 0.0
    %396 = vmatprep.subr.mxu0 0.0
    %397 = vmatpush1.msra.mxu0 0.0
    %398 = vmatprep.subr.mxu0 0.0
    %399 = vmatpush1.msra.mxu0 0.0
    %400 = vmatprep.subr.mxu0 0.0
    %401 = vmatpush1.msra.mxu0 0.0
    %402 = vmatprep.subr.mxu0 0.0
    %403 = vmatpush1.msra.mxu0 0.0
    %404 = vmatprep.subr.mxu0 0.0
    %405 = vmatpush1.msra.mxu0 0.0
    %406 = vmatprep.subr.mxu0 0.0
    %407 = vmatpush1.msra.mxu0 0.0
    %408 = vmatprep.subr.mxu0 0.0
    %409 = vmatpush1.msra.mxu0 0.0
    %410 = vmatprep.subr.mxu0 0.0
    %411 = vmatpush1.msra.mxu0 0.0
    %412 = vmatprep.subr.mxu0 0.0
    %413 = vmatpush1.msra.mxu0 0.0
    %414 = vmatprep.subr.mxu0 0.0
    %415 = vmatpush1.msra.mxu0 0.0
    %416 = vmatprep.subr.mxu0 0.0
    %417 = vmatpush1.msra.mxu0 0.0
    %418 = vmatprep.subr.mxu0 0.0
    %419 = vmatpush1.msra.mxu0 0.0
    %420 = vmatprep.subr.mxu0 0.0
    %421 = vmatpush1.msra.mxu0 0.0
    %422 = vmatprep.subr.mxu0 0.0
    %423 = vmatpush1.msra.mxu0 0.0
    %424 = vmatprep.subr.mxu0 0.0
    %425 = vmatpush1.msra.mxu0 0.0
    %426 = vmatprep.subr.mxu0 0.0
    %427 = vmatpush1.msra.mxu0 0.0
    %428 = vmatprep.subr.mxu0 0.0
    %429 = vmatpush1.msra.mxu0 0.0
    %430 = vmatprep.subr.mxu0 0.0
    %431 = vmatpush1.msra.mxu0 0.0
    %432 = vmatprep.subr.mxu0 0.0
    %433 = vmatpush1.msra.mxu0 0.0
    %434 = vmatprep.subr.mxu0 0.0
    %435 = vmatpush1.msra.mxu0 0.0
    %436 = vmatprep.subr.mxu0 0.0
    %437 = vmatpush1.msra.mxu0 0.0
    %438 = vmatprep.mubr.f32.mxu0 0.0
    %439 = vmatmul.mubr.f32.gmra.mrb[0].mxu0 %v369
    %v440 = vpop.f32.mrb[0].mxu0
    %v441 = vadd.f32 0.0, %v440
    %v442 = vpop.f32.mrb[0].mxu0
    %443 = vmatprep.mubr.f32.mxu0 0.0
    %444 = vmatmul.mubr.f32.gmra.mrb[0].mxu0 %v372
    %v445 = vpop.f32.mrb[0].mxu0
    %v446 = vadd.f32 0.0, %v445
    %v447 = vpop.f32.mrb[0].mxu0
    %448 = vdwg.mxu0
    %v449 = vld [vmem:[%s6] sm:$0xff]
    %v450 = vld [vmem:[%s7] sm:$0x1]
    %v451 = vld [vmem:[%s8] sm:$0xff]
    %v452 = vld [vmem:[%s9] sm:$0x1]
    %v454 = vlaneseq
    %v455 = vshrl.u32 %v454, 7
    %v456 = vsub.s32 0, %v455
    %v457 = vrot.slane %v450, %v456
    %v460 = vsel %vm51, %v441, 0
    %v463 = vsel %vm51, %v446, 0
    %v466 = vsel %vm51, %v449, 0
    %468 = vmatprep.subr.mxu0 0.0
    %469 = vmatpush1.xpose.msra.mxu0 %v466
    %470 = vmatprep.subr.mxu0 0.0
    %471 = vmatpush1.xpose.msra.mxu0 0.0
    %472 = vmatprep.subr.mxu0 0.0
    %473 = vmatpush1.xpose.msra.mxu0 0.0
    %474 = vmatprep.subr.mxu0 0.0
    %475 = vmatpush1.xpose.msra.mxu0 0.0
    %476 = vmatprep.subr.mxu0 0.0
    %477 = vmatpush1.xpose.msra.mxu0 0.0
    %478 = vmatprep.subr.mxu0 0.0
    %479 = vmatpush1.xpose.msra.mxu0 0.0
    %480 = vmatprep.subr.mxu0 0.0
    %481 = vmatpush1.xpose.msra.mxu0 0.0
    %482 = vmatprep.subr.mxu0 0.0
    %483 = vmatpush1.xpose.msra.mxu0 0.0
    %484 = vmatprep.subr.mxu0 0.0
    %485 = vmatpush1.xpose.msra.mxu0 0.0
    %486 = vmatprep.subr.mxu0 0.0
    %487 = vmatpush1.xpose.msra.mxu0 0.0
    %488 = vmatprep.subr.mxu0 0.0
    %489 = vmatpush1.xpose.msra.mxu0 0.0
    %490 = vmatprep.subr.mxu0 0.0
    %491 = vmatpush1.xpose.msra.mxu0 0.0
    %492 = vmatprep.subr.mxu0 0.0
    %493 = vmatpush1.xpose.msra.mxu0 0.0
    %494 = vmatprep.subr.mxu0 0.0
    %495 = vmatpush1.xpose.msra.mxu0 0.0
    %496 = vmatprep.subr.mxu0 0.0
    %497 = vmatpush1.xpose.msra.mxu0 0.0
    %498 = vmatprep.subr.mxu0 0.0
    %499 = vmatpush1.xpose.msra.mxu0 0.0
    %500 = vmatprep.subr.mxu0 0.0
    %501 = vmatpush1.xpose.msra.mxu0 0.0
    %502 = vmatprep.subr.mxu0 0.0
    %503 = vmatpush1.xpose.msra.mxu0 0.0
    %504 = vmatprep.subr.mxu0 0.0
    %505 = vmatpush1.xpose.msra.mxu0 0.0
    %506 = vmatprep.subr.mxu0 0.0
    %507 = vmatpush1.xpose.msra.mxu0 0.0
    %508 = vmatprep.subr.mxu0 0.0
    %509 = vmatpush1.xpose.msra.mxu0 0.0
    %510 = vmatprep.subr.mxu0 0.0
    %511 = vmatpush1.xpose.msra.mxu0 0.0
    %512 = vmatprep.subr.mxu0 0.0
    %513 = vmatpush1.xpose.msra.mxu0 0.0
    %514 = vmatprep.subr.mxu0 0.0
    %515 = vmatpush1.xpose.msra.mxu0 0.0
    %516 = vmatprep.subr.mxu0 0.0
    %517 = vmatpush1.xpose.msra.mxu0 0.0
    %518 = vmatprep.subr.mxu0 0.0
    %519 = vmatpush1.xpose.msra.mxu0 0.0
    %520 = vmatprep.subr.mxu0 0.0
    %521 = vmatpush1.xpose.msra.mxu0 0.0
    %522 = vmatprep.subr.mxu0 0.0
    %523 = vmatpush1.xpose.msra.mxu0 0.0
    %524 = vmatprep.subr.mxu0 0.0
    %525 = vmatpush1.xpose.msra.mxu0 0.0
    %526 = vmatprep.subr.mxu0 0.0
    %527 = vmatpush1.xpose.msra.mxu0 0.0
    %528 = vmatprep.subr.mxu0 0.0
    %529 = vmatpush1.xpose.msra.mxu0 0.0
    %530 = vmatprep.subr.mxu0 0.0
    %531 = vmatpush1.xpose.msra.mxu0 0.0
    %532 = vmatprep.mubr.f32.mxu0 0.0
    %533 = vmatmul.mubr.f32.gmra.mrb[0].mxu0 %v460
    %v534 = vpop.f32.mrb[0].mxu0
    %v535 = vadd.f32 %v457, %v534
    %v536 = vpop.f32.mrb[0].mxu0
    %537 = vmatprep.mubr.f32.mxu0 0.0
    %538 = vmatmul.mubr.f32.gmra.mrb[0].mxu0 %v463
    %v539 = vpop.f32.mrb[0].mxu0
    %v540 = vadd.f32 %v457, %v539
    %v541 = vpop.f32.mrb[0].mxu0
    %542 = vdwg.mxu0
    %v543 = vmax.f32 %v535, 0.0
    %v544 = vmax.f32 %v540, 0.0
    %v546 = vlaneseq
    %v547 = vshrl.u32 %v546, 7
    %v548 = vsub.s32 0, %v547
    %v549 = vrot.slane %v452, %v548
    %v552 = vsel %vm51, %v543, 0
    %v555 = vsel %vm51, %v544, 0
    %v558 = vsel %vm51, %v451, 0
    %560 = vmatprep.subr.mxu0 0.0
    %561 = vmatpush1.xpose.msra.mxu0 %v558
    %562 = vmatprep.subr.mxu0 0.0
    %563 = vmatpush1.xpose.msra.mxu0 0.0
    %564 = vmatprep.subr.mxu0 0.0
    %565 = vmatpush1.xpose.msra.mxu0 0.0
    %566 = vmatprep.subr.mxu0 0.0
    %567 = vmatpush1.xpose.msra.mxu0 0.0
    %568 = vmatprep.subr.mxu0 0.0
    %569 = vmatpush1.xpose.msra.mxu0 0.0
    %570 = vmatprep.subr.mxu0 0.0
    %571 = vmatpush1.xpose.msra.mxu0 0.0
    %572 = vmatprep.subr.mxu0 0.0
    %573 = vmatpush1.xpose.msra.mxu0 0.0
    %574 = vmatprep.subr.mxu0 0.0
    %575 = vmatpush1.xpose.msra.mxu0 0.0
    %576 = vmatprep.subr.mxu0 0.0
    %577 = vmatpush1.xpose.msra.mxu0 0.0
    %578 = vmatprep.subr.mxu0 0.0
    %579 = vmatpush1.xpose.msra.mxu0 0.0
    %580 = vmatprep.subr.mxu0 0.0
    %581 = vmatpush1.xpose.msra.mxu0 0.0
    %582 = vmatprep.subr.mxu0 0.0
    %583 = vmatpush1.xpose.msra.mxu0 0.0
    %584 = vmatprep.subr.mxu0 0.0
    %585 = vmatpush1.xpose.msra.mxu0 0.0
    %586 = vmatprep.subr.mxu0 0.0
    %587 = vmatpush1.xpose.msra.mxu0 0.0
    %588 = vmatprep.subr.mxu0 0.0
    %589 = vmatpush1.xpose.msra.mxu0 0.0
    %590 = vmatprep.subr.mxu0 0.0
    %591 = vmatpush1.xpose.msra.mxu0 0.0
    %592 = vmatprep.subr.mxu0 0.0
    %593 = vmatpush1.xpose.msra.mxu0 0.0
    %594 = vmatprep.subr.mxu0 0.0
    %595 = vmatpush1.xpose.msra.mxu0 0.0
    %596 = vmatprep.subr.mxu0 0.0
    %597 = vmatpush1.xpose.msra.mxu0 0.0
    %598 = vmatprep.subr.mxu0 0.0
    %599 = vmatpush1.xpose.msra.mxu0 0.0
    %600 = vmatprep.subr.mxu0 0.0
    %601 = vmatpush1.xpose.msra.mxu0 0.0
    %602 = vmatprep.subr.mxu0 0.0
    %603 = vmatpush1.xpose.msra.mxu0 0.0
    %604 = vmatprep.subr.mxu0 0.0
    %605 = vmatpush1.xpose.msra.mxu0 0.0
    %606 = vmatprep.subr.mxu0 0.0
    %607 = vmatpush1.xpose.msra.mxu0 0.0
    %608 = vmatprep.subr.mxu0 0.0
    %609 = vmatpush1.xpose.msra.mxu0 0.0
    %610 = vmatprep.subr.mxu0 0.0
    %611 = vmatpush1.xpose.msra.mxu0 0.0
    %612 = vmatprep.subr.mxu0 0.0
    %613 = vmatpush1.xpose.msra.mxu0 0.0
    %614 = vmatprep.subr.mxu0 0.0
    %615 = vmatpush1.xpose.msra.mxu0 0.0
    %616 = vmatprep.subr.mxu0 0.0
    %617 = vmatpush1.xpose.msra.mxu0 0.0
    %618 = vmatprep.subr.mxu0 0.0
    %619 = vmatpush1.xpose.msra.mxu0 0.0
    %620 = vmatprep.subr.mxu0 0.0
    %621 = vmatpush1.xpose.msra.mxu0 0.0
    %622 = vmatprep.subr.mxu0 0.0
    %623 = vmatpush1.xpose.msra.mxu0 0.0
    %624 = vmatprep.mubr.f32.mxu0 0.0
    %625 = vmatmul.mubr.f32.gmra.mrb[0].mxu0 %v552
    %v626 = vpop.f32.mrb[0].mxu0
    %v627 = vadd.f32 %v549, %v626
    %v628 = vpop.f32.mrb[0].mxu0
    %629 = vmatprep.mubr.f32.mxu0 0.0
    %630 = vmatmul.mubr.f32.gmra.mrb[0].mxu0 %v555
    %v631 = vpop.f32.mrb[0].mxu0
    %v632 = vadd.f32 %v549, %v631
    %v633 = vpop.f32.mrb[0].mxu0
    %634 = vdwg.mxu0
    %v635 = vsel %vm51, %v627, -inf
    %vm636 = vcmask 60416
    %v637 = vsel %vm636, %v632, -inf
    %v638 = vmax.f32 %v635, %v637
    %v639 = vrot.slane %v638, 4
    %v640 = vmax.f32 %v638, %v639
    %v641 = vrot.slane %v640, 2
    %v642 = vmax.f32 %v640, %v641
    %v643 = vrot.slane %v642, 1
    %v644 = vmax.f32 %v642, %v643
    %v645 = vsub.f32 %v627, %v644
    %v646 = vsub.f32 %v632, %v644
    %v647 = vmul.f32 %v645, 1.442695
    %v648 = vpow.pop %v647
    %v649 = vmul.f32 %v646, 1.442695
    %v650 = vpow.pop %v649
    %v651 = vsel %vm51, %v648, 0.0
    %v652 = vsel %vm636, %v650, 0.0
    %v653 = vadd.f32 %v651, %v652
    %v654 = vrot.slane %v653, 4
    %v655 = vadd.f32 %v653, %v654
    %v656 = vrot.slane %v655, 2
    %v657 = vadd.f32 %v655, %v656
    %v658 = vrot.slane %v657, 1
    %v659 = vadd.f32 %v657, %v658
    %v660 = vrcp.pop %v659
    %v661 = vmul.f32 %v648, %v660
    %v662 = vmul.f32 %v650, %v660
    %v664 = vsel %vm147, %v333, 0
    %vm666 = vcmask 1043456
    %v668 = vsel %vm666, %v662, 0
    %670 = vmatprep.subr.mxu0 0.0
    %671 = vmatpush1.msra.mxu0 %v661
    %672 = vmatprep.subr.mxu0 0.0
    %673 = vmatpush1.msra.mxu0 %v668
    %674 = vmatprep.subr.mxu0 0.0
    %675 = vmatpush1.msra.mxu0 0.0
    %676 = vmatprep.subr.mxu0 0.0
    %677 = vmatpush1.msra.mxu0 0.0
    %678 = vmatprep.subr.mxu0 0.0
    %679 = vmatpush1.msra.mxu0 0.0
    %680 = vmatprep.subr.mxu0 0.0
    %681 = vmatpush1.msra.mxu0 0.0
    %682 = vmatprep.subr.mxu0 0.0
    %683 = vmatpush1.msra.mxu0 0.0
    %684 = vmatprep.subr.mxu0 0.0
    %685 = vmatpush1.msra.mxu0 0.0
    %686 = vmatprep.subr.mxu0 0.0
    %687 = vmatpush1.msra.mxu0 0.0
    %688 = vmatprep.subr.mxu0 0.0
    %689 = vmatpush1.msra.mxu0 0.0
    %690 = vmatprep.subr.mxu0 0.0
    %691 = vmatpush1.msra.mxu0 0.0
    %692 = vmatprep.subr.mxu0 0.0
    %693 = vmatpush1.msra.mxu0 0.0
    %694 = vmatprep.subr.mxu0 0.0
    %695 = vmatpush1.msra.mxu0 0.0
    %696 = vmatprep.subr.mxu0 0.0
    %697 = vmatpush1.msra.mxu0 0.0
    %698 = vmatprep.subr.mxu0 0.0
    %699 = vmatpush1.msra.mxu0 0.0
    %700 = vmatprep.subr.mxu0 0.0
    %701 = vmatpush1.msra.mxu0 0.0
    %702 = vmatprep.subr.mxu0 0.0
    %703 = vmatpush1.msra.mxu0 0.0
    %704 = vmatprep.subr.mxu0 0.0
    %705 = vmatpush1.msra.mxu0 0.0
    %706 = vmatprep.subr.mxu0 0.0
    %707 = vmatpush1.msra.mxu0 0.0
    %708 = vmatprep.subr.mxu0 0.0
    %709 = vmatpush1.msra.mxu0 0.0
    %710 = vmatprep.subr.mxu0 0.0
    %711 = vmatpush1.msra.mxu0 0.0
    %712 = vmatprep.subr.mxu0 0.0
    %713 = vmatpush1.msra.mxu0 0.0
    %714 = vmatprep.subr.mxu0 0.0
    %715 = vmatpush1.msra.mxu0 0.0
    %716 = vmatprep.subr.mxu0 0.0
    %717 = vmatpush1.msra.mxu0 0.0
    %718 = vmatprep.subr.mxu0 0.0
    %719 = vmatpush1.msra.mxu0 0.0
    %720 = vmatprep.subr.mxu0 0.0
    %721 = vmatpush1.msra.mxu0 0.0
    %722 = vmatprep.subr.mxu0 0.0
    %723 = vmatpush1.msra.mxu0 0.0
    %724 = vmatprep.subr.mxu0 0.0
    %725 = vmatpush1.msra.mxu0 0.0
    %726 = vmatprep.subr.mxu0 0.0
    %727 = vmatpush1.msra.mxu0 0.0
    %728 = vmatprep.subr.mxu0 0.0
    %729 = vmatpush1.msra.mxu0 0.0
    %730 = vmatprep.subr.mxu0 0.0
    %731 = vmatpush1.msra.mxu0 0.0
    %732 = vmatprep.subr.mxu0 0.0
    %733 = vmatpush1.msra.mxu0 0.0
    %734 = vmatprep.mubr.f32.mxu0 0.0
    %735 = vmatmul.mubr.f32.gmra.mrb[0].mxu0 %v664
    %v736 = vpop.f32.mrb[0].mxu0
    %v737 = vadd.f32 0.0, %v736
    %v738 = vpop.f32.mrb[0].mxu0
    %739 = vdwg.mxu0
    %vm740 = vcmask 58368
    %741 = vst.msk [vmem:[#allocation2] sm:$0x3] %vm740, %v737
    // Predicated region
    $region42: #{tpu_custom_call.1} parent=1 // pred_check
      _
    $region43: #{tpu_custom_call.1} parent=1 // pred_check_branch
      %743 = sbr.rel (0) target = $region45
    $region44: #{tpu_custom_call.1} parent=1 // pred_region
      %s745 = ssub.s32 32, 32
      %746 = vsyncadd [#allocation3], %s745
      %s748 = sshll.u32 [#allocation2], 4
      %s749 = int_to_ptr.vmem [resolvable:$true] %s748
      %751 = dma.vmem_to_hbm [thread:$0]  %s749, 32, %s10, [#allocation3]
    $region45: #{tpu_custom_call.1} parent=1 // pred_fallthru
      _
    // Predicated region
    $region46: #{tpu_custom_call.1} parent=1 // pred_check
      _
    $region47: #{tpu_custom_call.1} parent=1 // pred_check_branch
      %753 = sbr.rel (0) target = $region49
    $region48: #{tpu_custom_call.1} parent=1 // pred_region
      %754 = dma.done [#allocation3], 32
    $region49: #{tpu_custom_call.1} parent=1 // pred_fallthru
      _
    %755 = vsyncpa [#allocation3], 1

</llo_original>
